<compile_context>
chip_gen: v7x
topology: tpu7x:2x2x1
jax: 0.10.0
libtpu: 0.0.40
codegen_flags: <defaults>
</compile_context>

<pallas_src>
import functools

import jax
import jax.numpy as jnp
from jax.experimental import pallas as pl
from jax.experimental.pallas import tpu as pltpu

_LANES = 128
_SUBLANES = 8


def _focal_loss_kernel(x_ref, t_ref, out_ref, *, gamma, alpha_vals, n_classes):
    # x_ref: (C, TR, 128) log-probabilities (per-class lane-dense slabs)
    # t_ref: (TR, 128) int32 class indices
    # out_ref: (8, 128) f32 partial loss sums for this grid step
    t = t_ref[...]

    # logpt = inputs.gather(1, target): select chain over classes (VPU only).
    logpt = x_ref[0].astype(jnp.float32)
    for c in range(1, n_classes):
        logpt = jnp.where(t == c, x_ref[c].astype(jnp.float32), logpt)

    pt = jnp.exp(logpt)  # single EUP transcendental per element

    if alpha_vals is not None:
        # at = alpha[target], alpha baked as compile-time constants.
        # NOTE: targets >= len(alpha) fall back to alpha[0] here; the PyTorch
        # reference would raise an out-of-bounds error in that case.
        at = jnp.full_like(logpt, alpha_vals[0])
        for c in range(1, len(alpha_vals)):
            at = jnp.where(t == c, alpha_vals[c], at)
        logpt = logpt * at

    u = 1.0 - pt
    if float(gamma).is_integer() and gamma >= 0:
        g = int(gamma)
        if g == 0:
            loss = -logpt
        else:
            w = u
            for _ in range(g - 1):
                w = w * u  # repeated VPU multiply instead of pow (no extra EUP)
            loss = -(w * logpt)
    else:
        loss = -(u ** gamma) * logpt  # non-integer gamma: fall back to pow

    # Fold the (TR, 128) loss tile into an (8, 128) vreg-shaped partial sum:
    # grouping the sublane dim by 8 keeps native (8,128) tiles intact, and the
    # leading-axis sum lowers to plain VPU adds (no cross-lane XLU work here).
    tr = loss.shape[0]
    out_ref[...] = jnp.sum(loss.reshape(tr // _SUBLANES, _SUBLANES, _LANES),
                           axis=0)


def focal_loss(inputs, target, *, gamma=2.0, alpha=None, size_average=True,
               tile_bytes=2 * 1024 * 1024):
    """inputs: (N, C) log-probabilities; target: (N,) int class indices."""
    n, c = inputs.shape

    # alpha handling mirrors FocalLoss.__init__ (scalar -> [a, 1 - a]).
    if alpha is None:
        alpha_vals = None
    elif isinstance(alpha, (float, int)):
        alpha_vals = (float(alpha), 1.0 - float(alpha))
    else:
        alpha_vals = tuple(
            float(v) for v in jax.device_get(jnp.asarray(alpha)).reshape(-1))

    # Lane-dense re-layout: put N on the lane axis, pad rows to sublane multiple.
    itemsize = jnp.dtype(inputs.dtype).itemsize
    r = pl.cdiv(n, _LANES)
    r = ((r + _SUBLANES - 1) // _SUBLANES) * _SUBLANES
    rows_budget = max(_SUBLANES, tile_bytes // (c * _LANES * itemsize))
    rows_budget = (rows_budget // _SUBLANES) * _SUBLANES
    tile_r = min(r, rows_budget)
    r_pad = ((r + tile_r - 1) // tile_r) * tile_r
    n_pad = r_pad * _LANES
    pad = n_pad - n

    # Padded samples: log-prob 0 for every class, target 0 -> zero loss
    # contribution for any gamma/alpha, so the sum is unaffected.
    xp = jnp.pad(inputs, ((0, pad), (0, 0)))
    tp = jnp.pad(target.reshape(-1).astype(jnp.int32), ((0, pad),))
    x_slabs = xp.T.reshape(c, r_pad, _LANES)   # (C, R, 128) per-class slabs
    t_slab = tp.reshape(r_pad, _LANES)         # (R, 128)

    grid = (r_pad // tile_r,)

    kernel = functools.partial(
        _focal_loss_kernel,
        gamma=float(gamma),
        alpha_vals=alpha_vals,
        n_classes=c,
    )

    partials = pl.pallas_call(
        kernel,
        out_shape=jax.ShapeDtypeStruct((_SUBLANES * grid[0], _LANES),
                                       jnp.float32),
        grid_spec=pltpu.PrefetchScalarGridSpec(
            num_scalar_prefetch=0,
            grid=grid,
            in_specs=[
                pl.BlockSpec((c, tile_r, _LANES), lambda i: (0, i, 0)),
                pl.BlockSpec((tile_r, _LANES), lambda i: (i, 0)),
            ],
            out_specs=pl.BlockSpec((_SUBLANES, _LANES), lambda i: (i, 0)),
        ),
        compiler_params=pltpu.CompilerParams(
            # Each step writes its own output block -> fully parallel, so the
            # grid can be sharded across both TensorCores on v7x.
            dimension_semantics=("parallel",),
        ),
    )(x_slabs, t_slab)

    total = jnp.sum(partials)
    return total / n if size_average else total


def focal_loss_ref(inputs, target, *, gamma=2.0, alpha=None, size_average=True):
    """Pure-JAX reference matching the PyTorch forward."""
    logpt = jnp.take_along_axis(inputs, target.reshape(-1, 1), axis=1).reshape(-1)
    pt = jnp.exp(logpt)
    if alpha is not None:
        at = jnp.asarray(alpha, dtype=inputs.dtype)[target]
        logpt = logpt * at
    loss = -1.0 * (1.0 - pt) ** gamma * logpt
    return loss.mean() if size_average else loss.sum()


if __name__ == "__main__":
    # Deterministic "params": focal_loss.gamma = 2.0, focal_loss.alpha = 0.25
    # -> alpha tensor = [0.25, 0.75] (binary case), as in FocalLoss.__init__.
    gamma = 2.0
    alpha_scalar = 0.25

    # Small shapes: batch=2, spatial=16x16, C=2 classes -> N = 2*16*16 = 512.
    key = jax.random.PRNGKey(0)
    k1, k2 = jax.random.split(key)
    N, C = 2 * 16 * 16, 2
    logits = jax.random.normal(k1, (N, C), dtype=jnp.float32)
    inputs = jax.nn.log_softmax(logits, axis=-1)          # log-probabilities
    target = jax.random.randint(k2, (N,), 0, C, dtype=jnp.int32)

    out = focal_loss(inputs, target, gamma=gamma, alpha=alpha_scalar,
                     size_average=True)
    out = jax.block_until_ready(out)

    ref = focal_loss_ref(
        inputs, target, gamma=gamma,
        alpha=jnp.array([alpha_scalar, 1.0 - alpha_scalar], dtype=jnp.float32),
        size_average=True)
    assert jnp.allclose(out, ref, rtol=1e-5, atol=1e-6), (out, ref)

    print("KERNEL_OK")
</pallas_src>

<mosaic_0001>
module attributes {stable_mosaic.version = 11 : i64} {
  func.func @_focal_loss_kernel(%arg0: i32, %arg1: memref<2x8x128xf32, #tpu.memory_space<vmem>>, %arg2: memref<8x128xi32, #tpu.memory_space<vmem>>, %arg3: memref<8x128xf32, #tpu.memory_space<vmem>>) attributes {dimension_semantics = [#tpu.dimension_semantics<parallel>], iteration_bounds = array<i64: 1>, scalar_prefetch = 0 : i64, scratch_operands = 0 : i64, tpu.core_type = #tpu.core_type<tc>, window_params = [{transform_indices = @transform_0, window_bounds = array<i64: 2, 8, 128>}, {transform_indices = @transform_1, window_bounds = array<i64: 8, 128>}, {transform_indices = @transform_2, window_bounds = array<i64: 8, 128>}]} {
    %c0 = arith.constant 0 : index
    %c0_0 = arith.constant 0 : index
    %0 = vector.load %arg2[%c0, %c0_0] : memref<8x128xi32, #tpu.memory_space<vmem>>, vector<8x128xi32>
    %c0_1 = arith.constant 0 : index
    %c0_2 = arith.constant 0 : index
    %c0_3 = arith.constant 0 : index
    %1 = vector.load %arg1[%c0_1, %c0_2, %c0_3] : memref<2x8x128xf32, #tpu.memory_space<vmem>>, vector<1x8x128xf32>
    %2 = vector.shape_cast %1 : vector<1x8x128xf32> to vector<8x128xf32>
    %c1_i32 = arith.constant 1 : i32
    %3 = vector.broadcast %c1_i32 : i32 to vector<8x128xi32>
    %4 = arith.cmpi eq, %0, %3 : vector<8x128xi32>
    %c1 = arith.constant 1 : index
    %c0_4 = arith.constant 0 : index
    %c0_5 = arith.constant 0 : index
    %5 = vector.load %arg1[%c1, %c0_4, %c0_5] : memref<2x8x128xf32, #tpu.memory_space<vmem>>, vector<1x8x128xf32>
    %6 = vector.shape_cast %5 : vector<1x8x128xf32> to vector<8x128xf32>
    %7 = arith.select %4, %6, %2 : vector<8x128xi1>, vector<8x128xf32>
    %8 = math.exp %7 : vector<8x128xf32>
    %cst = arith.constant 2.500000e-01 : f32
    %9 = vector.broadcast %cst : f32 to vector<8x128xf32>
    %c1_i32_6 = arith.constant 1 : i32
    %10 = vector.broadcast %c1_i32_6 : i32 to vector<8x128xi32>
    %11 = arith.cmpi eq, %0, %10 : vector<8x128xi32>
    %cst_7 = arith.constant 7.500000e-01 : f32
    %12 = vector.broadcast %cst_7 : f32 to vector<8x128xf32>
    %13 = arith.select %11, %12, %9 : vector<8x128xi1>, vector<8x128xf32>
    %14 = arith.mulf %7, %13 : vector<8x128xf32>
    %cst_8 = arith.constant 1.000000e+00 : f32
    %15 = vector.broadcast %cst_8 : f32 to vector<8x128xf32>
    %16 = arith.subf %15, %8 : vector<8x128xf32>
    %17 = arith.mulf %16, %16 : vector<8x128xf32>
    %18 = arith.mulf %17, %14 : vector<8x128xf32>
    %cst_9 = arith.constant 0.000000e+00 : f32
    %19 = vector.broadcast %cst_9 : f32 to vector<8x128xf32>
    %20 = arith.subf %19, %18 : vector<8x128xf32>
    %21 = vector.shape_cast %20 : vector<8x128xf32> to vector<1x8x128xf32>
    %cst_10 = arith.constant dense<0.000000e+00> : vector<8x128xf32>
    %22 = vector.multi_reduction <add>, %21, %cst_10 [0] : vector<1x8x128xf32> to vector<8x128xf32>
    %c0_11 = arith.constant 0 : index
    %c0_12 = arith.constant 0 : index
    %23 = vector.load %arg3[%c0_11, %c0_12] : memref<8x128xf32, #tpu.memory_space<vmem>>, vector<8x128xf32>
    tpu.vector_store %arg3[%c0_11, %c0_12], %22 {strides = array<i32>} : memref<8x128xf32, #tpu.memory_space<vmem>>, vector<8x128xf32>,
    return
  }
  func.func @transform_0(%arg0: i32) -> (i32, i32, i32) {
    %c0_i32 = arith.constant 0 : i32
    %c0_i32_0 = arith.constant 0 : i32
    %c0_i32_1 = arith.constant 0 : i32
    return %c0_i32, %arg0, %c0_i32_0 : i32, i32, i32
  }
  func.func @transform_1(%arg0: i32) -> (i32, i32) {
    %c0_i32 = arith.constant 0 : i32
    %c0_i32_0 = arith.constant 0 : i32
    return %arg0, %c0_i32 : i32, i32
  }
  func.func @transform_2(%arg0: i32) -> (i32, i32) {
    %c0_i32 = arith.constant 0 : i32
    %c0_i32_0 = arith.constant 0 : i32
    return %arg0, %c0_i32 : i32, i32
  }
}

</mosaic_0001>

<llo_original>
// kernel: tpu_custom_call.1
$region0: #{tpu_custom_call.1}
  #allocation0 [shape = 'u32[]', space=smem, size = 0x4, offset = 0x4, fixed_abs, tag = 'smem constant byte address 0x4 - core index']
  #allocation1 [shape = 'u32[144,128]{1,0:T(1,128)}', space=vmem, size = 0x12000, scoped, tag = 'internal scratch']
  %s0 = inlined_call_operand.hbm [shape: f32[2,8,128], index: 0, kind: input, shape index: {}]
  %s1 = inlined_call_operand.hbm [shape: s32[8,128], index: 1, kind: input, shape index: {}]
  %s2 = inlined_call_operand.hbm [shape: f32[8,128], index: 2, kind: output, shape index: {}]
  %s3 = sld [smem:[#allocation0]]
  $region26: #{tpu_custom_call.1} parent=0
    _
  %s5 = ssub.s32 1, %s3
  %s6 = scalar_select 0, %s5, %s3
  $region1: #{tpu_custom_call.1} parent=0
    #allocation2 [shape = 'u8[8192]{0}', space=vmem, size = 0x2000, scoped, tag = 'input window, operand 0, single buffered']
    #allocation3 [shape = 's32[1]{0}', space=sflag, size = 0x4, scoped, tag = 'scoped memory for tpu_custom_call.1']
    #allocation4 [shape = 's32[1]{0}', space=sflag, size = 0x4, scoped, tag = 'scoped memory for tpu_custom_call.1']
    #allocation5 [shape = 'u8[4096]{0}', space=vmem, size = 0x1000, scoped, tag = 'input window, operand 1, single buffered']
    #allocation6 [shape = 's32[1]{0}', space=sflag, size = 0x4, scoped, tag = 'scoped memory for tpu_custom_call.1']
    #allocation7 [shape = 'u8[4096]{0}', space=vmem, size = 0x1000, scoped, tag = 'output window, operand 0, single buffered']
    %7 = vsyncpa [#allocation3], 0
    %8 = vsyncpa [#allocation6], 0
    %9 = vsyncpa [#allocation4], 0
    // Predicated region
    $region2: #{tpu_custom_call.1} parent=1 // pred_check
      _
    $region3: #{tpu_custom_call.1} parent=1 // pred_check_branch
      %11 = sbr.rel (0) target = $region5
    $region4: #{tpu_custom_call.1} parent=1 // pred_region
      %s13 = ssub.s32 256, 256
      %14 = vsyncadd [#allocation3], %s13
      %s15 = sshll.u32 [#allocation2], 4
      %s16 = int_to_ptr.vmem [resolvable:$true] %s15
      %21 = dma.hbm_to_vmem [thread:$0]  %s0, 256, %s16, [#allocation3], 128, 128, 8
    $region5: #{tpu_custom_call.1} parent=1 // pred_fallthru
      _
    // Predicated region
    $region6: #{tpu_custom_call.1} parent=1 // pred_check
      _
    $region7: #{tpu_custom_call.1} parent=1 // pred_check_branch
      %23 = sbr.rel (0) target = $region9
    $region8: #{tpu_custom_call.1} parent=1 // pred_region
      %s25 = ssub.s32 128, 128
      %26 = vsyncadd [#allocation6], %s25
      %s28 = sshll.u32 [#allocation5], 4
      %s29 = int_to_ptr.vmem [resolvable:$true] %s28
      %31 = dma.hbm_to_vmem [thread:$0]  %s1, 128, %s29, [#allocation6]
    $region9: #{tpu_custom_call.1} parent=1 // pred_fallthru
      _
    // Predicated region
    $region10: #{tpu_custom_call.1} parent=1 // pred_check
      _
    $region11: #{tpu_custom_call.1} parent=1 // pred_check_branch
      %33 = sbr.rel (0) target = $region13
    $region12: #{tpu_custom_call.1} parent=1 // pred_region
      %34 = dma.done [#allocation3], 256
    $region13: #{tpu_custom_call.1} parent=1 // pred_fallthru
      _
    // Predicated region
    $region14: #{tpu_custom_call.1} parent=1 // pred_check
      _
    $region15: #{tpu_custom_call.1} parent=1 // pred_check_branch
      %36 = sbr.rel (0) target = $region17
    $region16: #{tpu_custom_call.1} parent=1 // pred_region
      %37 = dma.done [#allocation6], 128
    $region17: #{tpu_custom_call.1} parent=1 // pred_fallthru
      _
    %v38 = vld [vmem:[#allocation5] sm:$0xff]
    %v39 = vld [vmem:[#allocation2] sm:$0xff]
    %vm40 = vcmp.eq.s32.totalorder %v38, 1
    %s41 = scalar_lea.vmem [#allocation2], 8
    %v42 = vld [vmem:[%s41] sm:$0xff]
    %v43 = vsel %vm40, %v42, %v39
    %v44 = vmul.f32 %v43, 1.442695
    %v45 = vpow.pop %v44
    %v46 = vsel %vm40, 0.75, 0.25
    %v47 = vmul.f32 %v43, %v46
    %v48 = vsub.f32 1.0, %v45
    %v49 = vmul.f32 %v48, %v48
    %v50 = vmul.f32 %v49, %v47
    %v51 = vsub.f32 0.0, %v50
    %v52 = vadd.f32 %v51, 0.0
    %53 = vst [vmem:[#allocation7] sm:$0xff] %v52
    // Predicated region
    $region18: #{tpu_custom_call.1} parent=1 // pred_check
      _
    $region19: #{tpu_custom_call.1} parent=1 // pred_check_branch
      %55 = sbr.rel (0) target = $region21
    $region20: #{tpu_custom_call.1} parent=1 // pred_region
      %s57 = ssub.s32 128, 128
      %58 = vsyncadd [#allocation4], %s57
      %s60 = sshll.u32 [#allocation7], 4
      %s61 = int_to_ptr.vmem [resolvable:$true] %s60
      %63 = dma.vmem_to_hbm [thread:$0]  %s61, 128, %s2, [#allocation4]
    $region21: #{tpu_custom_call.1} parent=1 // pred_fallthru
      _
    // Predicated region
    $region22: #{tpu_custom_call.1} parent=1 // pred_check
      _
    $region23: #{tpu_custom_call.1} parent=1 // pred_check_branch
      %65 = sbr.rel (0) target = $region25
    $region24: #{tpu_custom_call.1} parent=1 // pred_region
      %66 = dma.done [#allocation4], 128
    $region25: #{tpu_custom_call.1} parent=1 // pred_fallthru
      _
    %67 = vsyncpa [#allocation3], 1
    %68 = vsyncpa [#allocation6], 1
    %69 = vsyncpa [#allocation4], 1

</llo_original>
